<compile_context>
chip_gen: v7x
topology: tpu7x:2x2x1
jax: 0.10.0
libtpu: 0.0.40
codegen_flags: <defaults>
</compile_context>

<pallas_src>
import functools

import jax
import jax.numpy as jnp
from jax.experimental import pallas as pl
from jax.experimental.pallas import tpu as pltpu


_NEG_BIG = -1e30  # finite "minus infinity": NaN-safe through exp()/max()


def _round_up(x, m):
    return ((x + m - 1) // m) * m


def _sublane(dtype):
    # native sublane tile: 8 rows for 4-byte, 16 for 2-byte, 32 for 1-byte
    return max(8, 32 // jnp.dtype(dtype).itemsize)


def _vmem_limit_bytes():
    """Generation-aware scoped-VMEM budget (v5e/v6e: 128 MiB, v7x: 64 MiB/TC)."""
    cap = 64 * 1024 * 1024
    try:
        info_cap = int(pltpu.get_tpu_info().vmem_capacity_bytes)
        if info_cap >= 16 * 1024 * 1024:
            cap = info_cap
    except Exception:
        pass
    return int(cap * 3 // 4)


# ---------------------------------------------------------------------------
# Tiled matmul (+ bias) kernel:  out = x @ w + b
# ---------------------------------------------------------------------------
def _matmul_bias_kernel(x_ref, w_ref, b_ref, o_ref, acc_ref):
    @pl.when(pl.program_id(2) == 0)
    def _():
        acc_ref[...] = jnp.zeros_like(acc_ref)

    acc_ref[...] += jnp.dot(
        x_ref[...], w_ref[...], preferred_element_type=jnp.float32
    )

    @pl.when(pl.program_id(2) == pl.num_programs(2) - 1)
    def _():
        o_ref[...] = (acc_ref[...] + b_ref[...]).astype(o_ref.dtype)


def pallas_matmul(x, w, bias=None, *, tm=512, tn=512, tk=1024, out_dtype=None):
    """Tiled (M,K)@(K,N)+bias with zero-padding to tile multiples."""
    M, K = x.shape
    K2, N = w.shape
    assert K == K2
    out_dtype = out_dtype or x.dtype
    if bias is None:
        bias = jnp.zeros((N,), jnp.float32)

    align = _sublane(x.dtype)
    tm = min(tm, _round_up(M, align))
    tn = min(tn, _round_up(N, 128))
    tk = min(tk, _round_up(K, 128))
    Mp, Np, Kp = _round_up(M, tm), _round_up(N, tn), _round_up(K, tk)

    if (Mp, Kp) != (M, K):
        x = jnp.pad(x, ((0, Mp - M), (0, Kp - K)))
    if (Kp, Np) != (K, N):
        w = jnp.pad(w, ((0, Kp - K), (0, Np - N)))
    b2d = jnp.pad(bias.astype(jnp.float32), (0, Np - N)).reshape(1, Np)

    grid = (Mp // tm, Np // tn, Kp // tk)
    out = pl.pallas_call(
        _matmul_bias_kernel,
        out_shape=jax.ShapeDtypeStruct((Mp, Np), out_dtype),
        grid=grid,
        in_specs=[
            pl.BlockSpec((tm, tk), lambda i, j, k: (i, k)),
            pl.BlockSpec((tk, tn), lambda i, j, k: (k, j)),
            pl.BlockSpec((1, tn), lambda i, j, k: (0, j)),
        ],
        out_specs=pl.BlockSpec((tm, tn), lambda i, j, k: (i, j)),
        scratch_shapes=[pltpu.VMEM((tm, tn), jnp.float32)],
        compiler_params=pltpu.CompilerParams(
            dimension_semantics=("parallel", "parallel", "arbitrary"),
            vmem_limit_bytes=_vmem_limit_bytes(),
        ),
    )(x, w, b2d)
    return out[:M, :N]


# ---------------------------------------------------------------------------
# Flash-style attention kernel (all heads per grid step, KV-tiled), with the
# output projection optionally fused into the finalize step.
# q/k/v blocks arrive as (1, t, H*dh) in the 'b n (h d)' layout; the output
# is written lane-dense as (1, tq, out_cols).
# ---------------------------------------------------------------------------
def _flash_attn_kernel(heads, dim_head, seq_len, needs_mask, fuse_out,
                       q_ref, k_ref, v_ref, *rest):
    if fuse_out:
        w_ref, b_ref, o_ref, m_sc, l_sc, acc_sc = rest
    else:
        o_ref, m_sc, l_sc, acc_sc = rest

    kv = pl.program_id(2)
    tk = k_ref.shape[1]

    @pl.when(kv == 0)
    def _():
        m_sc[...] = jnp.full(m_sc.shape, _NEG_BIG, jnp.float32)
        l_sc[...] = jnp.zeros(l_sc.shape, jnp.float32)
        acc_sc[...] = jnp.zeros(acc_sc.shape, jnp.float32)

    # Operands feed the MXU in their storage dtype (bf16 by default); only the
    # online-softmax state and the accumulators are f32.
    qb = q_ref[0]                            # (tq, H*dh); softmax scale folded into W_q
    kb = k_ref[0]                            # (tk, H*dh)
    vb = v_ref[0]                            # (tk, H*dh)

    if needs_mask:
        # Finite-negative additive bias for padded key columns (NaN-safe);
        # computed once per kv step, shared by all heads.
        key_pos = kv * tk + jax.lax.broadcasted_iota(jnp.int32, (1, tk), 1)
        s_bias = jnp.where(key_pos < seq_len,
                           jnp.float32(0.0), jnp.float32(_NEG_BIG))

    for h in range(heads):                   # static unroll over heads
        lo, hi = h * dim_head, (h + 1) * dim_head
        # Contract the last axes of q and k — no explicit k transpose.
        s = jax.lax.dot_general(
            qb[:, lo:hi], kb[:, lo:hi], (((1,), (1,)), ((), ())),
            preferred_element_type=jnp.float32)          # (tq, tk) f32
        if needs_mask:
            s = s + s_bias

        m_prev = m_sc[h]                                 # (tq, 1)
        m_new = jnp.maximum(m_prev, jnp.max(s, axis=-1, keepdims=True))
        alpha = jnp.exp(m_prev - m_new)
        p = jnp.exp(s - m_new)                           # (tq, tk) f32
        l_sc[h] = alpha * l_sc[h] + jnp.sum(p, axis=-1, keepdims=True)
        acc_sc[h] = alpha * acc_sc[h] + jnp.dot(
            p.astype(vb.dtype), vb[:, lo:hi],            # p back to bf16 for the MXU
            preferred_element_type=jnp.float32)
        m_sc[h] = m_new

    @pl.when(kv == pl.num_programs(2) - 1)
    def _():
        outs = []
        for h in range(heads):
            inv_l = pl.reciprocal(l_sc[h], approx=True)  # EUP slot, ~free
            outs.append(acc_sc[h] * inv_l)               # (tq, dh) f32
        attn_out = jnp.concatenate(outs, axis=-1)        # (tq, H*dh) f32
        if fuse_out:
            # Fused output projection: (tq, inner) @ (inner, dim) + bias.
            proj = jnp.dot(attn_out.astype(w_ref.dtype), w_ref[...],
                           preferred_element_type=jnp.float32)
            o_ref[0] = (proj + b_ref[...]).astype(o_ref.dtype)
        else:
            o_ref[0] = attn_out.astype(o_ref.dtype)


def pallas_flash_attention(qkv, heads, dim_head, *, w_out=None, b_out=None,
                           tq=512, tk=512, out_dtype=None):
    """qkv: [B, N, 3*inner] fused projection output ('[q|k|v]' along the last
    axis). Returns [B, N, dim] if w_out is given, else [B, N, inner]."""
    B, N, three_inner = qkv.shape
    inner = heads * dim_head
    assert three_inner == 3 * inner
    out_dtype = out_dtype or qkv.dtype
    fuse_out = w_out is not None

    align = _sublane(qkv.dtype)
    tq = min(tq, _round_up(N, align))
    tk = min(tk, _round_up(N, align))
    # v7x megacore: keep >=2 blocks on the parallel grid axes when possible.
    while (B * pl.cdiv(N, tq) < 2 and tq // 2 >= align
           and (tq // 2) % align == 0 and tk % (tq // 2) == 0):
        tq //= 2
    Np = _round_up(N, tk)          # tq divides tk, so Np is a multiple of both
    needs_mask = Np != N

    if Np != N:
        qkv = jnp.pad(qkv, ((0, 0), (0, Np - N), (0, 0)))

    if inner % 128 == 0:
        # q/k/v column blocks selected straight out of the fused qkv tensor
        # (lane-aligned): no HBM split / copy at all.
        q_in, k_in, v_in = qkv, qkv, qkv
        q_spec = pl.BlockSpec((1, tq, inner), lambda b, qi, ki: (b, qi, 0))
        k_spec = pl.BlockSpec((1, tk, inner), lambda b, qi, ki: (b, ki, 1))
        v_spec = pl.BlockSpec((1, tk, inner), lambda b, qi, ki: (b, ki, 2))
    else:
        # Small / unaligned head dims: one XLA split (cheap at these sizes).
        q_in = qkv[:, :, :inner]
        k_in = qkv[:, :, inner:2 * inner]
        v_in = qkv[:, :, 2 * inner:]
        q_spec = pl.BlockSpec((1, tq, inner), lambda b, qi, ki: (b, qi, 0))
        k_spec = pl.BlockSpec((1, tk, inner), lambda b, qi, ki: (b, ki, 0))
        v_spec = pl.BlockSpec((1, tk, inner), lambda b, qi, ki: (b, ki, 0))

    inputs = [q_in, k_in, v_in]
    in_specs = [q_spec, k_spec, v_spec]
    if fuse_out:
        out_cols = w_out.shape[1]
        b2d = (jnp.zeros((out_cols,), jnp.float32) if b_out is None
               else b_out.astype(jnp.float32)).reshape(1, out_cols)
        inputs += [w_out, b2d]
        in_specs += [
            pl.BlockSpec(w_out.shape, lambda b, qi, ki: (0, 0)),   # VMEM-resident
            pl.BlockSpec((1, out_cols), lambda b, qi, ki: (0, 0)),
        ]
    else:
        out_cols = inner

    kernel = functools.partial(
        _flash_attn_kernel, heads, dim_head, N, needs_mask, fuse_out)

    out = pl.pallas_call(
        kernel,
        out_shape=jax.ShapeDtypeStruct((B, Np, out_cols), out_dtype),
        grid=(B, Np // tq, Np // tk),
        in_specs=in_specs,
        out_specs=pl.BlockSpec((1, tq, out_cols), lambda b, qi, ki: (b, qi, 0)),
        scratch_shapes=[
            pltpu.VMEM((heads, tq, 1), jnp.float32),          # running max
            pltpu.VMEM((heads, tq, 1), jnp.float32),          # running denom
            pltpu.VMEM((heads, tq, dim_head), jnp.float32),   # running output
        ],
        compiler_params=pltpu.CompilerParams(
            dimension_semantics=("parallel", "parallel", "arbitrary"),
            vmem_limit_bytes=_vmem_limit_bytes(),
        ),
    )(*inputs)
    return out[:, :N, :]


# ---------------------------------------------------------------------------
# Attention module (forward only; dropout=0.0 -> identity)
# ---------------------------------------------------------------------------
class Attention:
    def __init__(self, dim, heads=8, dim_head=64, dropout=0.0, key=None,
                 compute_dtype=jnp.bfloat16):
        inner_dim = dim_head * heads
        self.heads = heads
        self.dim = dim
        self.dim_head = dim_head
        self.scale = dim_head ** (-0.5)
        self.project_out = not (heads == 1 and dim_head == dim)
        self.compute_dtype = compute_dtype
        # TODO(synk): dropout omitted (p=0.0 in this config -> identity at eval).

        if key is None:
            key = jax.random.PRNGKey(0)
        k1, k2, k3 = jax.random.split(key, 3)
        bound_qkv = 1.0 / (dim ** 0.5)
        w_qkv = jax.random.uniform(
            k1, (dim, inner_dim * 3), jnp.float32, -bound_qkv, bound_qkv)
        self._w_qkv_ref = w_qkv                         # f32, unscaled (reference)
        # Fold the 1/sqrt(dh) softmax scale into W_q so the kernel never
        # rescales q (the q block is re-read every kv step).
        self.w_qkv = w_qkv.at[:, :inner_dim].multiply(
            self.scale).astype(compute_dtype)

        if self.project_out:
            bound_out = 1.0 / (inner_dim ** 0.5)
            w_out = jax.random.uniform(
                k2, (inner_dim, dim), jnp.float32, -bound_out, bound_out)
            b_out = jax.random.uniform(
                k3, (dim,), jnp.float32, -bound_out, bound_out)
            self._w_out_ref, self._b_out_ref = w_out, b_out
            self.w_out = w_out.astype(compute_dtype)
            self.b_out = b_out                          # added in f32 in-kernel
        else:
            self._w_out_ref = self._b_out_ref = None
            self.w_out = self.b_out = None

    def __call__(self, x):
        B, N, D = x.shape
        inner = self.heads * self.dim_head

        xc = x.astype(self.compute_dtype).reshape(B * N, D)

        # --- to_qkv: one fused GEMM (x read from HBM once), bf16 output.
        qkv = pallas_matmul(xc, self.w_qkv, out_dtype=self.compute_dtype)
        qkv = qkv.reshape(B, N, 3 * inner)

        # --- flash attention with the output projection fused into finalize.
        out = pallas_flash_attention(
            qkv, self.heads, self.dim_head,
            w_out=self.w_out, b_out=self.b_out, out_dtype=x.dtype)
        return out


# ---------------------------------------------------------------------------
# Pure-JAX reference (f32 weights) for sanity checking
# ---------------------------------------------------------------------------
def reference_forward(module, x):
    B, N, D = x.shape
    H, dh = module.heads, module.dim_head
    qkv = x.astype(jnp.float32) @ module._w_qkv_ref
    q, k, v = jnp.split(qkv, 3, axis=-1)

    def sh(t):
        return t.reshape(B, N, H, dh).transpose(0, 2, 1, 3)

    q, k, v = sh(q), sh(k), sh(v)
    dots = jnp.einsum("bhnd,bhmd->bhnm", q, k) * module.scale
    attn = jax.nn.softmax(dots, axis=-1)
    out = jnp.einsum("bhnm,bhmd->bhnd", attn, v)
    out = out.transpose(0, 2, 1, 3).reshape(B, N, H * dh)
    if module.project_out:
        out = out @ module._w_out_ref + module._b_out_ref
    return out


if __name__ == "__main__":
    key = jax.random.PRNGKey(0)
    kx, kx2, kx4, kp1, kp2, kp3 = jax.random.split(key, 6)
    B, dim = 2, 32

    # 1) Main path: bf16 compute, inner = 4*32 = 128 (lane-aligned fused-QKV
    #    column selection + output projection fused into the flash finalize).
    x1 = jax.random.normal(kx, (B, 16, dim), jnp.float32)
    attn1 = Attention(dim, heads=4, dim_head=32, dropout=0.0, key=kp1)
    y1 = jax.block_until_ready(attn1(x1))
    r1 = reference_forward(attn1, x1)
    assert y1.shape == r1.shape
    e1 = float(jnp.max(jnp.abs(y1 - r1)))
    assert jnp.allclose(y1, r1, atol=3e-2, rtol=3e-2), f"bf16 path max err {e1}"

    # 2) Unaligned head dims (inner = 64 -> XLA split fallback), f32 compute.
    x2 = jax.random.normal(kx2, (B, 8, dim), jnp.float32)
    attn2 = Attention(dim, heads=4, dim_head=16, dropout=0.0, key=kp2,
                      compute_dtype=jnp.float32)
    y2 = jax.block_until_ready(attn2(x2))
    r2 = reference_forward(attn2, x2)
    e2 = float(jnp.max(jnp.abs(y2 - r2)))
    assert jnp.allclose(y2, r2, atol=1e-2, rtol=1e-2), f"f32 path max err {e2}"

    # 3) heads == 1 and dim_head == dim -> to_out is Identity (no fusion).
    attn3 = Attention(dim, heads=1, dim_head=dim, dropout=0.0, key=kp3)
    y3 = jax.block_until_ready(attn3(x1))
    r3 = reference_forward(attn3, x1)
    e3 = float(jnp.max(jnp.abs(y3 - r3)))
    assert jnp.allclose(y3, r3, atol=3e-2, rtol=3e-2), f"identity-out max err {e3}"

    # 4) Sequence length not a tile multiple -> exercises the padded-key mask.
    x4 = jax.random.normal(kx4, (B, 12, dim), jnp.float32)
    y4 = jax.block_until_ready(attn1(x4))
    r4 = reference_forward(attn1, x4)
    e4 = float(jnp.max(jnp.abs(y4 - r4)))
    assert jnp.allclose(y4, r4, atol=3e-2, rtol=3e-2), f"masked path max err {e4}"

    print("KERNEL_OK")
</pallas_src>

<mosaic_0001>
module attributes {stable_mosaic.version = 11 : i64} {
  func.func @_matmul_bias_kernel(%arg0: i32, %arg1: i32, %arg2: i32, %arg3: memref<32x128xbf16, #tpu.memory_space<vmem>>, %arg4: memref<128x384xbf16, #tpu.memory_space<vmem>>, %arg5: memref<1x384xf32, #tpu.memory_space<vmem>>, %arg6: memref<32x384xbf16, #tpu.memory_space<vmem>>, %arg7: memref<32x384xf32, #tpu.memory_space<vmem>>) attributes {dimension_semantics = [#tpu.dimension_semantics<parallel>, #tpu.dimension_semantics<parallel>, #tpu.dimension_semantics<arbitrary>], iteration_bounds = array<i64: 1, 1, 1>, scalar_prefetch = 0 : i64, scratch_operands = 1 : i64, tpu.core_type = #tpu.core_type<tc>, window_params = [{transform_indices = @transform_0, window_bounds = array<i64: 32, 128>}, {transform_indices = @transform_1, window_bounds = array<i64: 128, 384>}, {transform_indices = @transform_2, window_bounds = array<i64: 1, 384>}, {transform_indices = @transform_3, window_bounds = array<i64: 32, 384>}]} {
    %c0_i32 = arith.constant 0 : i32
    %0 = arith.cmpi eq, %arg2, %c0_i32 : i32
    %1 = arith.extui %0 : i1 to i32
    %c0_i32_0 = arith.constant 0 : i32
    %2 = arith.cmpi ne, %1, %c0_i32_0 : i32
    scf.if %2 {
      %cst_10 = arith.constant 0.000000e+00 : f32
      %12 = vector.broadcast %cst_10 : f32 to vector<32x384xf32>
      %c0_11 = arith.constant 0 : index
      %c0_12 = arith.constant 0 : index
      %13 = vector.load %arg7[%c0_11, %c0_12] : memref<32x384xf32, #tpu.memory_space<vmem>>, vector<32x384xf32>
      tpu.vector_store %arg7[%c0_11, %c0_12], %12 {strides = array<i32>} : memref<32x384xf32, #tpu.memory_space<vmem>>, vector<32x384xf32>,
    } else {
    }
    %c0 = arith.constant 0 : index
    %c0_1 = arith.constant 0 : index
    %3 = vector.load %arg7[%c0, %c0_1] : memref<32x384xf32, #tpu.memory_space<vmem>>, vector<32x384xf32>
    %c0_2 = arith.constant 0 : index
    %c0_3 = arith.constant 0 : index
    %4 = vector.load %arg3[%c0_2, %c0_3] : memref<32x128xbf16, #tpu.memory_space<vmem>>, vector<32x128xbf16>
    %c0_4 = arith.constant 0 : index
    %c0_5 = arith.constant 0 : index
    %5 = vector.load %arg4[%c0_4, %c0_5] : memref<128x384xbf16, #tpu.memory_space<vmem>>, vector<128x384xbf16>
    %cst = arith.constant dense<0.000000e+00> : vector<32x384xf32>
    %6 = tpu.matmul %4, %5, %cst {dimension_numbers = #tpu.dot_dimension_numbers<[1], [0], [0], [1], [0, 0, 1, 1], [], []>} : vector<32x128xbf16>, vector<128x384xbf16>, vector<32x384xf32> -> vector<32x384xf32>
    %7 = arith.addf %3, %6 : vector<32x384xf32>
    %c0_6 = arith.constant 0 : index
    %c0_7 = arith.constant 0 : index
    %8 = vector.load %arg7[%c0_6, %c0_7] : memref<32x384xf32, #tpu.memory_space<vmem>>, vector<32x384xf32>
    tpu.vector_store %arg7[%c0_6, %c0_7], %7 {strides = array<i32>} : memref<32x384xf32, #tpu.memory_space<vmem>>, vector<32x384xf32>,
    %c0_i32_8 = arith.constant 0 : i32
    %9 = arith.cmpi eq, %arg2, %c0_i32_8 : i32
    %10 = arith.extui %9 : i1 to i32
    %c0_i32_9 = arith.constant 0 : i32
    %11 = arith.cmpi ne, %10, %c0_i32_9 : i32
    scf.if %11 {
      %c0_10 = arith.constant 0 : index
      %c0_11 = arith.constant 0 : index
      %12 = vector.load %arg7[%c0_10, %c0_11] : memref<32x384xf32, #tpu.memory_space<vmem>>, vector<32x384xf32>
      %c0_12 = arith.constant 0 : index
      %c0_13 = arith.constant 0 : index
      %13 = vector.load %arg5[%c0_12, %c0_13] : memref<1x384xf32, #tpu.memory_space<vmem>>, vector<1x384xf32>
      %14 = vector.broadcast %13 : vector<1x384xf32> to vector<32x384xf32>
      %15 = arith.addf %12, %14 : vector<32x384xf32>
      %16 = arith.truncf %15 : vector<32x384xf32> to vector<32x384xbf16>
      %c0_14 = arith.constant 0 : index
      %c0_15 = arith.constant 0 : index
      %17 = vector.load %arg6[%c0_14, %c0_15] : memref<32x384xbf16, #tpu.memory_space<vmem>>, vector<32x384xbf16>
      tpu.vector_store %arg6[%c0_14, %c0_15], %16 {strides = array<i32>} : memref<32x384xbf16, #tpu.memory_space<vmem>>, vector<32x384xbf16>,
    } else {
    }
    return
  }
  func.func @transform_0(%arg0: i32, %arg1: i32, %arg2: i32) -> (i32, i32) {
    %c0_i32 = arith.constant 0 : i32
    return %arg0, %arg2 : i32, i32
  }
  func.func @transform_1(%arg0: i32, %arg1: i32, %arg2: i32) -> (i32, i32) {
    %c0_i32 = arith.constant 0 : i32
    return %arg2, %arg1 : i32, i32
  }
  func.func @transform_2(%arg0: i32, %arg1: i32, %arg2: i32) -> (i32, i32) {
    %c0_i32 = arith.constant 0 : i32
    %c0_i32_0 = arith.constant 0 : i32
    return %c0_i32, %arg1 : i32, i32
  }
  func.func @transform_3(%arg0: i32, %arg1: i32, %arg2: i32) -> (i32, i32) {
    %c0_i32 = arith.constant 0 : i32
    return %arg0, %arg1 : i32, i32
  }
}

</mosaic_0001>

<llo_original>
// kernel: tpu_custom_call.1
$region0: #{tpu_custom_call.1}
  #allocation0 [shape = 'u32[]', space=smem, size = 0x4, offset = 0x4, fixed_abs, tag = 'smem constant byte address 0x4 - core index']
  #allocation1 [shape = 'u32[144,128]{1,0:T(1,128)}', space=vmem, size = 0x12000, scoped, tag = 'internal scratch']
  #allocation2 [shape = 'f32[32,384]{1,0:T(8,128)}', space=vmem, size = 0xc000, scoped, tag = 'scratch operand']
  %s0 = inlined_call_operand.hbm [shape: bf16[32,128], index: 0, kind: input, shape index: {}]
  %s1 = inlined_call_operand.hbm [shape: bf16[128,384], index: 1, kind: input, shape index: {}]
  %s2 = inlined_call_operand.vmem [shape: f32[1,384], index: 2, kind: input, shape index: {}]
  %s3 = inlined_call_operand.hbm [shape: bf16[32,384], index: 3, kind: output, shape index: {}]
  %s4 = sld [smem:[#allocation0]]
  $region38: #{tpu_custom_call.1} parent=0
    _
  %s6 = ssub.s32 1, %s4
  %s7 = scalar_select 0, %s6, %s4
  $region1: #{tpu_custom_call.1} parent=0
    #allocation3 [shape = 'u8[8192]{0}', space=vmem, size = 0x2000, scoped, tag = 'input window, operand 0, single buffered']
    #allocation4 [shape = 's32[1]{0}', space=sflag, size = 0x4, scoped, tag = 'scoped memory for tpu_custom_call.1']
    #allocation5 [shape = 's32[1]{0}', space=sflag, size = 0x4, scoped, tag = 'scoped memory for tpu_custom_call.1']
    #allocation6 [shape = 'u8[98304]{0}', space=vmem, size = 0x18000, scoped, tag = 'input window, operand 1, single buffered']
    #allocation7 [shape = 's32[1]{0}', space=sflag, size = 0x4, scoped, tag = 'scoped memory for tpu_custom_call.1']
    #allocation8 [shape = 'u8[24576]{0}', space=vmem, size = 0x6000, scoped, tag = 'output window, operand 0, single buffered']
    %8 = vsyncpa [#allocation4], 0
    %9 = vsyncpa [#allocation7], 0
    %10 = vsyncpa [#allocation5], 0
    // Predicated region
    $region2: #{tpu_custom_call.1} parent=1 // pred_check
      _
    $region3: #{tpu_custom_call.1} parent=1 // pred_check_branch
      %12 = sbr.rel (0) target = $region5
    $region4: #{tpu_custom_call.1} parent=1 // pred_region
      %s14 = ssub.s32 256, 256
      %15 = vsyncadd [#allocation4], %s14
      %s16 = sshll.u32 [#allocation3], 4
      %s17 = int_to_ptr.vmem [resolvable:$true] %s16
      %22 = dma.hbm_to_vmem [thread:$0]  %s0, 256, %s17, [#allocation4], 64, 64, 4
    $region5: #{tpu_custom_call.1} parent=1 // pred_fallthru
      _
    // Predicated region
    $region6: #{tpu_custom_call.1} parent=1 // pred_check
      _
    $region7: #{tpu_custom_call.1} parent=1 // pred_check_branch
      %24 = sbr.rel (0) target = $region9
    $region8: #{tpu_custom_call.1} parent=1 // pred_region
      %s26 = ssub.s32 3072, 3072
      %27 = vsyncadd [#allocation7], %s26
      %s28 = sshll.u32 [#allocation6], 4
      %s29 = int_to_ptr.vmem [resolvable:$true] %s28
      %34 = dma.hbm_to_vmem [thread:$0]  %s1, 3072, %s29, [#allocation7], 192, 192, 12
    $region9: #{tpu_custom_call.1} parent=1 // pred_fallthru
      _
    // Predicated region
    $region10: #{tpu_custom_call.1} parent=1 // pred_check
      _
    $region11: #{tpu_custom_call.1} parent=1 // pred_check_branch
      %36 = sbr.rel (0) target = $region13
    $region12: #{tpu_custom_call.1} parent=1 // pred_region
      _
    $region13: #{tpu_custom_call.1} parent=1 // pred_fallthru
      _
    // Predicated region
    $region14: #{tpu_custom_call.1} parent=1 // pred_check
      _
    $region15: #{tpu_custom_call.1} parent=1 // pred_check_branch
      %38 = sbr.rel (0) target = $region17
    $region16: #{tpu_custom_call.1} parent=1 // pred_region
      %39 = dma.done [#allocation4], 256
    $region17: #{tpu_custom_call.1} parent=1 // pred_fallthru
      _
    // Predicated region
    $region18: #{tpu_custom_call.1} parent=1 // pred_check
      _
    $region19: #{tpu_custom_call.1} parent=1 // pred_check_branch
      %41 = sbr.rel (0) target = $region21
    $region20: #{tpu_custom_call.1} parent=1 // pred_region
      %42 = dma.done [#allocation7], 3072
    $region21: #{tpu_custom_call.1} parent=1 // pred_fallthru
      _
    %p44 = scmp.eq.s32.totalorder 0, 0
    // Predicated region
    $region22: #{tpu_custom_call.1} parent=1 // pred_check
      %p45 = pneg %p44
    $region23: #{tpu_custom_call.1} parent=1 // pred_check_branch
      %47 = sbr.rel (%p45) target = $region25
    $region24: #{tpu_custom_call.1} parent=1 // pred_region
      %48 = vst [vmem:[#allocation2] sm:$0xff] 0.0
      %49 = vst [vmem:[#allocation2 + $0x8] sm:$0xff] 0.0
      %50 = vst [vmem:[#allocation2 + $0x10] sm:$0xff] 0.0
      %51 = vst [vmem:[#allocation2 + $0x18] sm:$0xff] 0.0
      %52 = vst [vmem:[#allocation2 + $0x20] sm:$0xff] 0.0
      %53 = vst [vmem:[#allocation2 + $0x28] sm:$0xff] 0.0
      %54 = vst [vmem:[#allocation2 + $0x30] sm:$0xff] 0.0
      %55 = vst [vmem:[#allocation2 + $0x38] sm:$0xff] 0.0
      %56 = vst [vmem:[#allocation2 + $0x40] sm:$0xff] 0.0
      %57 = vst [vmem:[#allocation2 + $0x48] sm:$0xff] 0.0
      %58 = vst [vmem:[#allocation2 + $0x50] sm:$0xff] 0.0
      %59 = vst [vmem:[#allocation2 + $0x58] sm:$0xff] 0.0
    $region25: #{tpu_custom_call.1} parent=1 // pred_fallthru
      _
    %v60 = vld [vmem:[#allocation2] sm:$0xff]
    %v61 = vld [vmem:[#allocation2 + $0x8] sm:$0xff]
    %v62 = vld [vmem:[#allocation2 + $0x10] sm:$0xff]
    %v63 = vld [vmem:[#allocation2 + $0x18] sm:$0xff]
    %v64 = vld [vmem:[#allocation2 + $0x20] sm:$0xff]
    %v65 = vld [vmem:[#allocation2 + $0x28] sm:$0xff]
    %v66 = vld [vmem:[#allocation2 + $0x30] sm:$0xff]
    %v67 = vld [vmem:[#allocation2 + $0x38] sm:$0xff]
    %v68 = vld [vmem:[#allocation2 + $0x40] sm:$0xff]
    %v69 = vld [vmem:[#allocation2 + $0x48] sm:$0xff]
    %v70 = vld [vmem:[#allocation2 + $0x50] sm:$0xff]
    %v71 = vld [vmem:[#allocation2 + $0x58] sm:$0xff]
    %v72 = vld [vmem:[#allocation3] sm:$0xf]
    %v73 = vld [vmem:[#allocation3 + $0x4] sm:$0xf]
    %v74 = vld [vmem:[#allocation3 + $0x8] sm:$0xf]
    %v75 = vld [vmem:[#allocation3 + $0xc] sm:$0xf]
    %v76 = vld [vmem:[#allocation6] sm:$0xff]
    %v77 = vld [vmem:[#allocation6 + $0x8] sm:$0xf]
    %v78 = vld [vmem:[#allocation6 + $0xc] sm:$0xff]
    %v79 = vld [vmem:[#allocation6 + $0x14] sm:$0xf]
    %v80 = vld [vmem:[#allocation6 + $0x18] sm:$0xff]
    %v81 = vld [vmem:[#allocation6 + $0x20] sm:$0xf]
    %v82 = vld [vmem:[#allocation6 + $0x24] sm:$0xff]
    %v83 = vld [vmem:[#allocation6 + $0x2c] sm:$0xf]
    %v84 = vld [vmem:[#allocation6 + $0x30] sm:$0xff]
    %v85 = vld [vmem:[#allocation6 + $0x38] sm:$0xf]
    %v86 = vld [vmem:[#allocation6 + $0x3c] sm:$0xff]
    %v87 = vld [vmem:[#allocation6 + $0x44] sm:$0xf]
    %v88 = vld [vmem:[#allocation6 + $0x48] sm:$0xff]
    %v89 = vld [vmem:[#allocation6 + $0x50] sm:$0xf]
    %v90 = vld [vmem:[#allocation6 + $0x54] sm:$0xff]
    %v91 = vld [vmem:[#allocation6 + $0x5c] sm:$0xf]
    %v92 = vld [vmem:[#allocation6 + $0x60] sm:$0xff]
    %v93 = vld [vmem:[#allocation6 + $0x68] sm:$0xf]
    %v94 = vld [vmem:[#allocation6 + $0x6c] sm:$0xff]
    %v95 = vld [vmem:[#allocation6 + $0x74] sm:$0xf]
    %v96 = vld [vmem:[#allocation6 + $0x78] sm:$0xff]
    %v97 = vld [vmem:[#allocation6 + $0x80] sm:$0xf]
    %v98 = vld [vmem:[#allocation6 + $0x84] sm:$0xff]
    %v99 = vld [vmem:[#allocation6 + $0x8c] sm:$0xf]
    %v100 = vld [vmem:[#allocation6 + $0x90] sm:$0xff]
    %v101 = vld [vmem:[#allocation6 + $0x98] sm:$0xf]
    %v102 = vld [vmem:[#allocation6 + $0x9c] sm:$0xff]
    %v103 = vld [vmem:[#allocation6 + $0xa4] sm:$0xf]
    %v104 = vld [vmem:[#allocation6 + $0xa8] sm:$0xff]
    %v105 = vld [vmem:[#allocation6 + $0xb0] sm:$0xf]
    %v106 = vld [vmem:[#allocation6 + $0xb4] sm:$0xff]
    %v107 = vld [vmem:[#allocation6 + $0xbc] sm:$0xf]
    %v112 = vunpack.c.l.b16 %v72
    %v113 = vunpack.c.l.b16 %v73
    %v114 = vunpack.c.l.b16 %v74
    %v115 = vunpack.c.l.b16 %v75
    %v116 = vpack.c.b16 %v113, %v112
    %v117 = vpack.c.b16 %v115, %v114
    %v152 = vunpack.c.l.b16 %v76
    %v153 = vunpack.c.h.b16 %v76
    %v154 = vunpack.c.l.b16 %v77
    %v155 = vunpack.c.l.b16 %v78
    %v156 = vunpack.c.h.b16 %v78
    %v157 = vunpack.c.l.b16 %v79
    %v158 = vunpack.c.l.b16 %v80
    %v159 = vunpack.c.h.b16 %v80
    %v160 = vunpack.c.l.b16 %v81
    %v161 = vunpack.c.l.b16 %v82
    %v162 = vunpack.c.h.b16 %v82
    %v163 = vunpack.c.l.b16 %v83
    %v164 = vunpack.c.l.b16 %v84
    %v165 = vunpack.c.h.b16 %v84
    %v166 = vunpack.c.l.b16 %v85
    %v167 = vunpack.c.l.b16 %v86
    %v168 = vunpack.c.h.b16 %v86
    %v169 = vunpack.c.l.b16 %v87
    %v170 = vunpack.c.l.b16 %v88
    %v171 = vunpack.c.h.b16 %v88
    %v172 = vunpack.c.l.b16 %v89
    %v173 = vunpack.c.l.b16 %v90
    %v174 = vunpack.c.h.b16 %v90
    %v175 = vunpack.c.l.b16 %v91
    %v176 = vunpack.c.l.b16 %v92
    %v177 = vunpack.c.h.b16 %v92
    %v178 = vunpack.c.l.b16 %v93
    %v179 = vunpack.c.l.b16 %v94
    %v180 = vunpack.c.h.b16 %v94
    %v181 = vunpack.c.l.b16 %v95
    %v182 = vunpack.c.l.b16 %v96
    %v183 = vunpack.c.h.b16 %v96
    %v184 = vunpack.c.l.b16 %v97
    %v185 = vunpack.c.l.b16 %v98
    %v186 = vunpack.c.h.b16 %v98
    %v187 = vunpack.c.l.b16 %v99
    %v188 = vunpack.c.l.b16 %v100
    %v189 = vunpack.c.h.b16 %v100
    %v190 = vunpack.c.l.b16 %v101
    %v191 = vunpack.c.l.b16 %v102
    %v192 = vunpack.c.h.b16 %v102
    %v193 = vunpack.c.l.b16 %v103
    %v194 = vunpack.c.l.b16 %v104
    %v195 = vunpack.c.h.b16 %v104
    %v196 = vunpack.c.l.b16 %v105
    %v197 = vunpack.c.l.b16 %v106
    %v198 = vunpack.c.h.b16 %v106
    %v199 = vunpack.c.l.b16 %v107
    %v200 = vpack.c.b16 %v155, %v152
    %v201 = vpack.c.b16 %v156, %v153
    %v202 = vpack.c.b16 %v157, %v154
    %v203 = vpack.c.b16 %v161, %v158
    %v204 = vpack.c.b16 %v162, %v159
    %v205 = vpack.c.b16 %v163, %v160
    %v206 = vpack.c.b16 %v167, %v164
    %v207 = vpack.c.b16 %v168, %v165
    %v208 = vpack.c.b16 %v169, %v166
    %v209 = vpack.c.b16 %v173, %v170
    %v210 = vpack.c.b16 %v174, %v171
    %v211 = vpack.c.b16 %v175, %v172
    %v212 = vpack.c.b16 %v179, %v176
    %v213 = vpack.c.b16 %v180, %v177
    %v214 = vpack.c.b16 %v181, %v178
    %v215 = vpack.c.b16 %v185, %v182
    %v216 = vpack.c.b16 %v186, %v183
    %v217 = vpack.c.b16 %v187, %v184
    %v218 = vpack.c.b16 %v191, %v188
    %v219 = vpack.c.b16 %v192, %v189
    %v220 = vpack.c.b16 %v193, %v190
    %v221 = vpack.c.b16 %v197, %v194
    %v222 = vpack.c.b16 %v198, %v195
    %v223 = vpack.c.b16 %v199, %v196
    %248 = vmatprep.subr.bf16.mxu0 %v201
    %249 = vmatpush1.bf16.msra.mxu0 %v200
    %250 = vmatprep.subr.bf16.mxu0 %v204
    %251 = vmatpush1.bf16.msra.mxu0 %v203
    %252 = vmatprep.subr.bf16.mxu0 %v207
    %253 = vmatpush1.bf16.msra.mxu0 %v206
    %254 = vmatprep.subr.bf16.mxu0 %v210
    %255 = vmatpush1.bf16.msra.mxu0 %v209
    %256 = vmatprep.subr.bf16.mxu0 %v213
    %257 = vmatpush1.bf16.msra.mxu0 %v212
    %258 = vmatprep.subr.bf16.mxu0 %v216
    %259 = vmatpush1.bf16.msra.mxu0 %v215
    %260 = vmatprep.subr.bf16.mxu0 %v219
    %261 = vmatpush1.bf16.msra.mxu0 %v218
    %262 = vmatprep.subr.bf16.mxu0 %v222
    %263 = vmatpush1.bf16.msra.mxu0 %v221
    %264 = vmatprep.subr.bf16.mxu0 0
    %265 = vmatpush1.bf16.msra.mxu0 0
    %266 = vmatprep.subr.bf16.mxu0 0
    %267 = vmatpush1.bf16.msra.mxu0 0
    %268 = vmatprep.subr.bf16.mxu0 0
    %269 = vmatpush1.bf16.msra.mxu0 0
    %270 = vmatprep.subr.bf16.mxu0 0
    %271 = vmatpush1.bf16.msra.mxu0 0
    %272 = vmatprep.subr.bf16.mxu0 0
    %273 = vmatpush1.bf16.msra.mxu0 0
    %274 = vmatprep.subr.bf16.mxu0 0
    %275 = vmatpush1.bf16.msra.mxu0 0
    %276 = vmatprep.subr.bf16.mxu0 0
    %277 = vmatpush1.bf16.msra.mxu0 0
    %278 = vmatprep.subr.bf16.mxu0 0
    %279 = vmatpush1.bf16.msra.mxu0 0
    %280 = vmatprep.mubr.bf16.mxu0 0
    %281 = vmatmul.mubr.bf16.gmra.mrb[0].mxu0 %v116
    %v282 = vpop.f32.mrb[0].mxu0
    %v283 = vadd.f32 0.0, %v282
    %v284 = vpop.f32.mrb[0].mxu0
    %v285 = vadd.f32 0.0, %v284
    %v286 = vpop.f32.mrb[0].mxu0
    %v287 = vadd.f32 0.0, %v286
    %v288 = vpop.f32.mrb[0].mxu0
    %v289 = vadd.f32 0.0, %v288
    %290 = vmatprep.mubr.bf16.mxu0 0
    %291 = vmatmul.mubr.bf16.gmra.mrb[0].mxu0 %v117
    %v292 = vpop.f32.mrb[0].mxu0
    %v293 = vadd.f32 0.0, %v292
    %v294 = vpop.f32.mrb[0].mxu0
    %v295 = vadd.f32 0.0, %v294
    %v296 = vpop.f32.mrb[0].mxu0
    %v297 = vadd.f32 0.0, %v296
    %v298 = vpop.f32.mrb[0].mxu0
    %v299 = vadd.f32 0.0, %v298
    %300 = vdwg.mxu0
    %301 = vmatprep.subr.bf16.mxu0 0
    %302 = vmatpush1.bf16.msra.mxu0 %v202
    %303 = vmatprep.subr.bf16.mxu0 0
    %304 = vmatpush1.bf16.msra.mxu0 %v205
    %305 = vmatprep.subr.bf16.mxu0 0
    %306 = vmatpush1.bf16.msra.mxu0 %v208
    %307 = vmatprep.subr.bf16.mxu0 0
    %308 = vmatpush1.bf16.msra.mxu0 %v211
    %309 = vmatprep.subr.bf16.mxu0 0
    %310 = vmatpush1.bf16.msra.mxu0 %v214
    %311 = vmatprep.subr.bf16.mxu0 0
    %312 = vmatpush1.bf16.msra.mxu0 %v217
    %313 = vmatprep.subr.bf16.mxu0 0
    %314 = vmatpush1.bf16.msra.mxu0 %v220
    %315 = vmatprep.subr.bf16.mxu0 0
    %316 = vmatpush1.bf16.msra.mxu0 %v223
    %317 = vmatprep.subr.bf16.mxu0 0
    %318 = vmatpush1.bf16.msra.mxu0 0
    %319 = vmatprep.subr.bf16.mxu0 0
    %320 = vmatpush1.bf16.msra.mxu0 0
    %321 = vmatprep.subr.bf16.mxu0 0
    %322 = vmatpush1.bf16.msra.mxu0 0
    %323 = vmatprep.subr.bf16.mxu0 0
    %324 = vmatpush1.bf16.msra.mxu0 0
    %325 = vmatprep.subr.bf16.mxu0 0
    %326 = vmatpush1.bf16.msra.mxu0 0
    %327 = vmatprep.subr.bf16.mxu0 0
    %328 = vmatpush1.bf16.msra.mxu0 0
    %329 = vmatprep.subr.bf16.mxu0 0
    %330 = vmatpush1.bf16.msra.mxu0 0
    %331 = vmatprep.subr.bf16.mxu0 0
    %332 = vmatpush1.bf16.msra.mxu0 0
    %333 = vmatprep.mubr.bf16.mxu0 0
    %334 = vmatmul.mubr.bf16.gmra.mrb[0].mxu0 %v116
    %v335 = vpop.f32.mrb[0].mxu0
    %v336 = vadd.f32 0.0, %v335
    %v337 = vpop.f32.mrb[0].mxu0
    %v338 = vpop.f32.mrb[0].mxu0
    %v339 = vadd.f32 0.0, %v338
    %v340 = vpop.f32.mrb[0].mxu0
    %341 = vmatprep.mubr.bf16.mxu0 0
    %342 = vmatmul.mubr.bf16.gmra.mrb[0].mxu0 %v117
    %v343 = vpop.f32.mrb[0].mxu0
    %v344 = vadd.f32 0.0, %v343
    %v345 = vpop.f32.mrb[0].mxu0
    %v346 = vpop.f32.mrb[0].mxu0
    %v347 = vadd.f32 0.0, %v346
    %v348 = vpop.f32.mrb[0].mxu0
    %349 = vdwg.mxu0
    %v350 = vadd.f32 %v60, %v283
    %v351 = vadd.f32 %v61, %v285
    %v352 = vadd.f32 %v62, %v336
    %v353 = vadd.f32 %v63, %v287
    %v354 = vadd.f32 %v64, %v289
    %v355 = vadd.f32 %v65, %v339
    %v356 = vadd.f32 %v66, %v293
    %v357 = vadd.f32 %v67, %v295
    %v358 = vadd.f32 %v68, %v344
    %v359 = vadd.f32 %v69, %v297
    %v360 = vadd.f32 %v70, %v299
    %v361 = vadd.f32 %v71, %v347
    %362 = vst [vmem:[#allocation2] sm:$0xff] %v350
    %363 = vst [vmem:[#allocation2 + $0x8] sm:$0xff] %v351
    %364 = vst [vmem:[#allocation2 + $0x10] sm:$0xff] %v352
    %365 = vst [vmem:[#allocation2 + $0x18] sm:$0xff] %v353
    %366 = vst [vmem:[#allocation2 + $0x20] sm:$0xff] %v354
    %367 = vst [vmem:[#allocation2 + $0x28] sm:$0xff] %v355
    %368 = vst [vmem:[#allocation2 + $0x30] sm:$0xff] %v356
    %369 = vst [vmem:[#allocation2 + $0x38] sm:$0xff] %v357
    %370 = vst [vmem:[#allocation2 + $0x40] sm:$0xff] %v358
    %371 = vst [vmem:[#allocation2 + $0x48] sm:$0xff] %v359
    %372 = vst [vmem:[#allocation2 + $0x50] sm:$0xff] %v360
    %373 = vst [vmem:[#allocation2 + $0x58] sm:$0xff] %v361
    // Predicated region
    $region26: #{tpu_custom_call.1} parent=1 // pred_check
      %p374 = pneg %p44
    $region27: #{tpu_custom_call.1} parent=1 // pred_check_branch
      %376 = sbr.rel (%p374) target = $region29
    $region28: #{tpu_custom_call.1} parent=1 // pred_region
      %v377 = vld [vmem:[#allocation2] sm:$0xff]
      %v378 = vld [vmem:[#allocation2 + $0x8] sm:$0xff]
      %v379 = vld [vmem:[#allocation2 + $0x10] sm:$0xff]
      %v380 = vld [vmem:[#allocation2 + $0x18] sm:$0xff]
      %v381 = vld [vmem:[#allocation2 + $0x20] sm:$0xff]
      %v382 = vld [vmem:[#allocation2 + $0x28] sm:$0xff]
      %v383 = vld [vmem:[#allocation2 + $0x30] sm:$0xff]
      %v384 = vld [vmem:[#allocation2 + $0x38] sm:$0xff]
      %v385 = vld [vmem:[#allocation2 + $0x40] sm:$0xff]
      %v386 = vld [vmem:[#allocation2 + $0x48] sm:$0xff]
      %v387 = vld [vmem:[#allocation2 + $0x50] sm:$0xff]
      %v388 = vld [vmem:[#allocation2 + $0x58] sm:$0xff]
      %v389 = vld [vmem:[%s2] sm:$0x7]
      %v391 = vlaneseq
      %v392 = vshrl.u32 %v391, 7
      %v393 = vsub.s32 0, %v392
      %v394 = vrot.slane %v389, %v393
      %v395 = vlaneseq
      %v396 = vshrl.u32 %v395, 7
      %v397 = vsub.s32 1, %v396
      %v398 = vrot.slane %v389, %v397
      %v399 = vlaneseq
      %v400 = vshrl.u32 %v399, 7
      %v401 = vsub.s32 2, %v400
      %v402 = vrot.slane %v389, %v401
      %v406 = vadd.f32 %v377, %v394
      %v407 = vadd.f32 %v378, %v398
      %v408 = vadd.f32 %v379, %v402
      %v409 = vadd.f32 %v380, %v394
      %v410 = vadd.f32 %v381, %v398
      %v411 = vadd.f32 %v382, %v402
      %v412 = vadd.f32 %v383, %v394
      %v413 = vadd.f32 %v384, %v398
      %v414 = vadd.f32 %v385, %v402
      %v415 = vadd.f32 %v386, %v394
      %v416 = vadd.f32 %v387, %v398
      %v417 = vadd.f32 %v388, %v402
      %v418 = vpack.c.bf16 %v409, %v406
      %v419 = vpack.c.bf16 %v410, %v407
      %v420 = vpack.c.bf16 %v411, %v408
      %v421 = vpack.c.bf16 %v415, %v412
      %v422 = vpack.c.bf16 %v416, %v413
      %v423 = vpack.c.bf16 %v417, %v414
      %v430 = vunpack.c.l.b16 %v418
      %v431 = vunpack.c.l.b16 %v419
      %v432 = vunpack.c.l.b16 %v420
      %v433 = vunpack.c.h.b16 %v418
      %v434 = vunpack.c.h.b16 %v419
      %v435 = vunpack.c.h.b16 %v420
      %v436 = vunpack.c.l.b16 %v421
      %v437 = vunpack.c.l.b16 %v422
      %v438 = vunpack.c.l.b16 %v423
      %v439 = vunpack.c.h.b16 %v421
      %v440 = vunpack.c.h.b16 %v422
      %v441 = vunpack.c.h.b16 %v423
      %v442 = vpack.c.b16 %v431, %v430
      %v443 = vpack.c.b16 %v432, %v432
      %v444 = vpack.c.b16 %v434, %v433
      %v445 = vpack.c.b16 %v435, %v435
      %v446 = vpack.c.b16 %v437, %v436
      %v447 = vpack.c.b16 %v438, %v438
      %v448 = vpack.c.b16 %v440, %v439
      %v449 = vpack.c.b16 %v441, %v441
      %458 = vst [vmem:[#allocation8] sm:$0xff] %v442
      %459 = vst [vmem:[#allocation8 + $0x8] sm:$0xf] %v443
      %460 = vst [vmem:[#allocation8 + $0xc] sm:$0xff] %v444
      %461 = vst [vmem:[#allocation8 + $0x14] sm:$0xf] %v445
      %462 = vst [vmem:[#allocation8 + $0x18] sm:$0xff] %v446
      %463 = vst [vmem:[#allocation8 + $0x20] sm:$0xf] %v447
      %464 = vst [vmem:[#allocation8 + $0x24] sm:$0xff] %v448
      %465 = vst [vmem:[#allocation8 + $0x2c] sm:$0xf] %v449
    $region29: #{tpu_custom_call.1} parent=1 // pred_fallthru
      _
    // Predicated region
    $region30: #{tpu_custom_call.1} parent=1 // pred_check
      _
    $region31: #{tpu_custom_call.1} parent=1 // pred_check_branch
      %467 = sbr.rel (0) target = $region33
    $region32: #{tpu_custom_call.1} parent=1 // pred_region
      %s469 = ssub.s32 768, 768
      %470 = vsyncadd [#allocation5], %s469
      %s471 = sshll.u32 [#allocation8], 4
      %s472 = int_to_ptr.vmem [resolvable:$true] %s471
      %477 = dma.vmem_to_hbm [thread:$0]  %s472, 768, %s3, [#allocation5], 192, 192, 12
    $region33: #{tpu_custom_call.1} parent=1 // pred_fallthru
      _
    // Predicated region
    $region34: #{tpu_custom_call.1} parent=1 // pred_check
      _
    $region35: #{tpu_custom_call.1} parent=1 // pred_check_branch
      %479 = sbr.rel (0) target = $region37
    $region36: #{tpu_custom_call.1} parent=1 // pred_region
      %480 = dma.done [#allocation5], 768
    $region37: #{tpu_custom_call.1} parent=1 // pred_fallthru
      _
    %481 = vsyncpa [#allocation4], 1
    %482 = vsyncpa [#allocation7], 1
    %483 = vsyncpa [#allocation5], 1

</llo_original>
